<compile_context>
chip_gen: v7x
topology: tpu7x:2x2x1
jax: 0.10.0
libtpu: 0.0.40
codegen_flags: <defaults>
</compile_context>

<pallas_src>
import functools

import jax
import jax.numpy as jnp
import numpy as np
from jax.experimental import pallas as pl
from jax.experimental.pallas import tpu as pltpu

FP8_MAX = 448.0  # max finite value of float8_e4m3fn
LANE = 128


def _round_up(v, m):
    return (v + m - 1) // m * m


def _round_to_e4m3_grid(q):
    """Round nonnegative f32 values already scaled into [0, 448] to the float8_e4m3fn value
    grid (round-to-nearest-even on the top 3 mantissa bits), keeping the result in f32.
    Only valid for non-negative finite inputs (sign bit ignored).
    # TODO(synk): e4m3 subnormals (< 2**-6) keep 3-bit *relative* precision here instead of the
    # fixed 2**-9 quantum of true e4m3fn; deviation < 2**-9 of the row amax (negligible)."""
    u = pltpu.bitcast(q, jnp.int32)
    lsb = (u >> 20) & 1                                   # LSB of the kept 3-bit mantissa
    u = (u + lsb + 0x7FFFF) & jnp.int32(-(1 << 20))       # RNE + clear dropped 20 bits
    return pltpu.bitcast(u, jnp.float32)


# ------------------------------ fused Pallas kernel ------------------------------

def _fused_srelu_sp24_fp8_linear_kernel(x_ref, wt_ref, ws_ref, o_ref,
                                        xq_ref, xs_ref, acc_ref):
    """Fused squared-ReLU -> 2:4 sparsify -> rowwise fp8(e4m3) quant -> scaled matmul.

    grid = (rows i, out-cols j, reduction k)

    x_ref  : [tm, Kp]      bf16       activation rows (full padded feature extent)
    wt_ref : [tk, tn]      fp8/bf16   pre-transposed quantized weight values
    ws_ref : [1, tn]       f32        per-out-feature weight scales
    o_ref  : [tm, tn]      bf16       output tile
    xq_ref : [nk, tm, tk]  bf16       scratch: quantized activations (persist across j, k)
    xs_ref : [tm, 1]       f32        scratch: rowwise activation scales
    acc_ref: [tm, tn]      f32        scratch: matmul accumulator
    """
    j = pl.program_id(1)
    k = pl.program_id(2)
    nk = xq_ref.shape[0]          # static
    tk = xq_ref.shape[2]          # static

    # ---- once per row tile: srelu -> 2:4 sparsify -> rowwise e4m3 quant into VMEM scratch ----
    @pl.when((j == 0) & (k == 0))
    def _():
        y = x_ref[...].astype(jnp.float32)
        y = jnp.maximum(y, 0.0)
        y = y * y                                          # squared ReLU ("srelu")

        K = y.shape[-1]
        lane = jax.lax.broadcasted_iota(jnp.int32, y.shape, dimension=1)
        mem = lane & 3                                     # member index inside the group of 4

        # rank[b, c] = #{group members strictly larger} + #{equal members with lower index}.
        # Loop over neighbor distance d: the other member sits at column c+d (no wrap) or
        # c+d-4 (wrap); a wrap means the other member has a LOWER group index (tie-break).
        # Only 2 rolls + 1 select live per distance (rolls ride the XLU slot, free vs VALU).
        rank = jnp.zeros(y.shape, jnp.int32)
        for d in (1, 2, 3):
            fwd = pltpu.roll(y, shift=(-d) % K, axis=1)    # value at column c + d
            bwd = pltpu.roll(y, shift=4 - d, axis=1)       # value at column c + d - 4
            wrapped = mem >= (4 - d)                       # other member has lower group index
            other = jnp.where(wrapped, bwd, fwd)
            beats = (other > y) | ((other == y) & wrapped)
            rank = rank + beats.astype(jnp.int32)

        z = jnp.where(rank < 2, y, 0.0)                    # keep the 2 largest per group

        amax = jnp.max(z, axis=-1, keepdims=True)          # rowwise amax (values >= 0)
        safe = jnp.maximum(amax, 1e-12)
        inv = FP8_MAX / safe                               # (tm,1): avoids a full-width divide
        q = jnp.clip(z * inv, 0.0, FP8_MAX)
        q = _round_to_e4m3_grid(q)                         # e4m3 value grid, exact in bf16
        qb = q.astype(jnp.bfloat16)
        for kk in range(nk):                               # static unroll: fill the K-sliced scratch
            xq_ref[kk] = qb[:, kk * tk:(kk + 1) * tk]
        xs_ref[...] = safe * (1.0 / FP8_MAX)               # X_scale for the epilogue

    # ---- K-sliced matmul: bf16 x bf16 -> f32 accumulate on the MXU ----
    @pl.when(k == 0)
    def _():
        acc_ref[...] = jnp.zeros_like(acc_ref)

    a = xq_ref[k]                                          # (tm, tk), dynamic leading index
    w = wt_ref[...].astype(jnp.bfloat16)                   # fp8 weight values are exact in bf16
    acc_ref[...] += jnp.dot(a, w, preferred_element_type=jnp.float32)

    @pl.when(k == pl.num_programs(2) - 1)
    def _():
        o_ref[...] = (acc_ref[...] * xs_ref[...] * ws_ref[...]).astype(o_ref.dtype)


# -------------------------------- init-time helpers --------------------------------

def quantize_weight_fp8_rowwise(weight):
    """__init__: per-row (per out_feature) fp8 e4m3fn quantization of the bf16 weight [N, K]."""
    wf = weight.astype(jnp.float32)
    amax = jnp.max(jnp.abs(wf), axis=1, keepdims=True)            # [N, 1]
    w_scale = jnp.maximum(amax, 1e-12) / FP8_MAX
    wq = jnp.clip(wf / w_scale, -FP8_MAX, FP8_MAX).astype(jnp.float8_e4m3fn)
    return wq, w_scale


def prepare_weight_operands(wq, w_scale, store_dtype=jnp.float8_e4m3fn):
    """__init__ (once, NOT per forward): transpose the fp8 weight to the matmul-ready
    [Kp, Np] layout (kept as fp8 by default so the kernel streams 1 B/elem from HBM) and
    lay the per-out-feature scales out as a lane-dense [1, Np] row, zero-padded to 128."""
    N, K = wq.shape
    Kp, Np = _round_up(K, LANE), _round_up(N, LANE)
    wt = jnp.zeros((Kp, Np), jnp.float32).at[:K, :N].set(wq.astype(jnp.float32).T)
    wt = wt.astype(store_dtype)                    # e4m3 values are exact in fp8/bf16/f32
    ws = jnp.zeros((1, Np), jnp.float32).at[:, :N].set(
        w_scale.reshape(1, N).astype(jnp.float32))
    return wt, ws


# ------------------------------------- forward -------------------------------------

@functools.partial(jax.jit, static_argnums=(3,))
def fp8_semi_sparse_activation_linear(x, wt, ws, n_out):
    """Forward pass.  x: [B, K] bf16; wt: [Kp, Np] fp8/bf16 (pre-transposed quantized weight
    values); ws: [1, Np] f32 weight scales.  Returns [B, n_out] bfloat16."""
    B, K = x.shape
    Kp, Np = wt.shape
    assert K % 4 == 0, "in_features must be divisible by 4 for 2:4 sparsity"
    assert Kp == _round_up(K, LANE) and Np % LANE == 0

    # --- tile selection (generation-agnostic; sized so everything fits v7x's 64 MiB VMEM) ---
    tn = next(t for t in (512, 256, 128) if Np % t == 0)           # lane-dense output stores
    tk = next(t for t in (2048, 1024, 512, 256, 128) if Kp % t == 0)
    # Cap the once-per-row-tile activation working set (~20 live bytes/elem of f32/i32 temps).
    tm_cap = max(16, min(256, ((24 << 20) // (20 * Kp)) // 16 * 16))
    if B >= 256:
        tm = min(256, tm_cap)           # bigger row tile => more weight reuse per HBM byte
    elif B >= 128:
        tm = min(128, tm_cap)
    else:
        tm = min(_round_up(B, 16), 128, tm_cap)   # 16 = native bf16 sublane tile
    Bp = _round_up(B, tm)
    nk = Kp // tk

    xp = x.astype(jnp.bfloat16)
    if (Bp, Kp) != (B, K):
        xp = jnp.zeros((Bp, Kp), jnp.bfloat16).at[:B, :K].set(xp)

    wt_bytes = jnp.dtype(wt.dtype).itemsize
    vmem_est = (2 * tm * Kp * 2            # x tiles (double-buffered, bf16)
                + 2 * tk * tn * wt_bytes   # weight tiles
                + 2 * tn * 4               # weight-scale tiles
                + 2 * tm * tn * 2          # output tiles
                + tm * Kp * 2 + tm * 4     # xq / xs scratch
                + tm * tn * 4              # accumulator scratch
                + 20 * tm * Kp)            # activation-phase temporaries (heuristic)
    vmem_limit = int(min(56 << 20, max(32 << 20, int(vmem_est * 1.25))))

    cost = pl.CostEstimate(
        flops=2 * Bp * Kp * Np,
        transcendentals=0,
        bytes_accessed=Bp * Kp * 2 + Kp * Np * wt_bytes + Np * 4 + Bp * Np * 2)

    out = pl.pallas_call(
        _fused_srelu_sp24_fp8_linear_kernel,
        out_shape=jax.ShapeDtypeStruct((Bp, Np), jnp.bfloat16),
        grid_spec=pltpu.PrefetchScalarGridSpec(
            num_scalar_prefetch=0,
            grid=(Bp // tm, Np // tn, nk),
            in_specs=[
                pl.BlockSpec((tm, Kp), lambda i, j, k: (i, 0)),   # activations (bf16)
                pl.BlockSpec((tk, tn), lambda i, j, k: (k, j)),   # Wq^T values (fp8/bf16)
                pl.BlockSpec((1, tn), lambda i, j, k: (0, j)),    # W_scale row (f32)
            ],
            out_specs=pl.BlockSpec((tm, tn), lambda i, j, k: (i, j)),
            scratch_shapes=[pltpu.VMEM((nk, tm, tk), jnp.bfloat16),   # Xq values
                            pltpu.VMEM((tm, 1), jnp.float32),         # X_scale
                            pltpu.VMEM((tm, tn), jnp.float32)],       # accumulator
        ),
        compiler_params=pltpu.CompilerParams(
            dimension_semantics=("parallel", "arbitrary", "arbitrary"),
            vmem_limit_bytes=vmem_limit),
        cost_estimate=cost,
    )(xp, wt, ws)
    return out[:B, :n_out]


# ------------------------------- pure-JAX reference --------------------------------

def reference_forward(x, wq, w_scale):
    xf = x.astype(jnp.float32)
    B, K = xf.shape
    y = jnp.square(jnp.maximum(xf, 0.0)).reshape(B, K // 4, 4)
    a = y[..., :, None]                      # y_i
    b = y[..., None, :]                      # y_j
    jlt = jnp.arange(4)[None, :] < jnp.arange(4)[:, None]        # [i, j]: j < i
    rank = jnp.sum(((b > a) | ((b == a) & jlt)).astype(jnp.int32), axis=-1)
    z = jnp.where(rank < 2, y, 0.0).reshape(B, K)
    amax = jnp.max(z, axis=-1, keepdims=True)
    x_scale = jnp.maximum(amax, 1e-12) / FP8_MAX
    xq = jnp.clip(z / x_scale, 0.0, FP8_MAX).astype(jnp.float8_e4m3fn)
    acc = jnp.dot(xq.astype(jnp.float32), wq.astype(jnp.float32).T,
                  preferred_element_type=jnp.float32)
    return (acc * x_scale * w_scale.reshape(1, -1)).astype(jnp.bfloat16)


# --------------------------------------- main ---------------------------------------

if __name__ == "__main__":
    key = jax.random.PRNGKey(0)
    kx, kw = jax.random.split(key)

    B, K, N = 16, 64, 32     # batch, in_features, out_features
    x = jax.random.normal(kx, (B, K), dtype=jnp.float32).astype(jnp.bfloat16)
    weight = (0.1 * jax.random.normal(kw, (N, K), dtype=jnp.float32)).astype(jnp.bfloat16)

    # __init__: rowwise fp8 quantization of the bf16 weight + matmul-ready layout (once).
    wq, w_scale = quantize_weight_fp8_rowwise(weight)
    try:
        wt, ws = prepare_weight_operands(wq, w_scale, store_dtype=jnp.float8_e4m3fn)
        out = jax.block_until_ready(fp8_semi_sparse_activation_linear(x, wt, ws, N))
    except Exception:
        # TODO(synk): fallback for toolchains that can't lower in-kernel fp8->bf16 casts;
        # bf16 weight storage doubles weight HBM traffic but is numerically identical.
        wt, ws = prepare_weight_operands(wq, w_scale, store_dtype=jnp.bfloat16)
        out = jax.block_until_ready(fp8_semi_sparse_activation_linear(x, wt, ws, N))

    assert out.shape == (B, N) and out.dtype == jnp.bfloat16

    ref = reference_forward(x, wq, w_scale)
    np.testing.assert_allclose(np.asarray(out, dtype=np.float32),
                               np.asarray(ref, dtype=np.float32),
                               rtol=5e-2, atol=5e-2)
    print("KERNEL_OK")
</pallas_src>

<mosaic_0001>
module attributes {stable_mosaic.version = 11 : i64} {
  func.func @_fused_srelu_sp24_fp8_linear_kernel(%arg0: i32, %arg1: i32, %arg2: i32, %arg3: memref<16x128xbf16, #tpu.memory_space<vmem>>, %arg4: memref<128x128xf8E4M3FN, #tpu.memory_space<vmem>>, %arg5: memref<1x128xf32, #tpu.memory_space<vmem>>, %arg6: memref<16x128xbf16, #tpu.memory_space<vmem>>, %arg7: memref<1x16x128xbf16, #tpu.memory_space<vmem>>, %arg8: memref<16x1xf32, #tpu.memory_space<vmem>>, %arg9: memref<16x128xf32, #tpu.memory_space<vmem>>) attributes {dimension_semantics = [#tpu.dimension_semantics<parallel>, #tpu.dimension_semantics<arbitrary>, #tpu.dimension_semantics<arbitrary>], iteration_bounds = array<i64: 1, 1, 1>, scalar_prefetch = 0 : i64, scratch_operands = 3 : i64, tpu.core_type = #tpu.core_type<tc>, window_params = [{transform_indices = @transform_0, window_bounds = array<i64: 16, 128>}, {transform_indices = @transform_1, window_bounds = array<i64: 128, 128>}, {transform_indices = @transform_2, window_bounds = array<i64: 1, 128>}, {transform_indices = @transform_3, window_bounds = array<i64: 16, 128>}]} {
    %c0_i32 = arith.constant 0 : i32
    %0 = arith.cmpi eq, %arg1, %c0_i32 : i32
    %c0_i32_0 = arith.constant 0 : i32
    %1 = arith.cmpi eq, %arg2, %c0_i32_0 : i32
    %2 = arith.andi %0, %1 : i1
    %3 = arith.extui %2 : i1 to i32
    %c0_i32_1 = arith.constant 0 : i32
    %4 = arith.cmpi ne, %3, %c0_i32_1 : i32
    scf.if %4 {
      %c0_13 = arith.constant 0 : index
      %c0_14 = arith.constant 0 : index
      %20 = vector.load %arg3[%c0_13, %c0_14] : memref<16x128xbf16, #tpu.memory_space<vmem>>, vector<16x128xbf16>
      %21 = arith.extf %20 : vector<16x128xbf16> to vector<16x128xf32>
      %cst_15 = arith.constant 0.000000e+00 : f32
      %22 = vector.broadcast %cst_15 : f32 to vector<16x128xf32>
      %23 = arith.maximumf %21, %22 : vector<16x128xf32>
      %24 = arith.mulf %23, %23 : vector<16x128xf32>
      %25 = tpu.iota {dimensions = array<i32: 1>} : vector<16x128xi32>
      %c3_i32 = arith.constant 3 : i32
      %26 = vector.broadcast %c3_i32 : i32 to vector<16x128xi32>
      %27 = arith.andi %25, %26 : vector<16x128xi32>
      %c0_i32_16 = arith.constant 0 : i32
      %28 = vector.broadcast %c0_i32_16 : i32 to vector<16x128xi32>
      %c127_i32 = arith.constant 127 : i32
      %29 = tpu.dynamic_rotate %24 by %c127_i32 dim 1 : vector<16x128xf32>, i32 -> vector<16x128xf32>
      %c3_i32_17 = arith.constant 3 : i32
      %30 = tpu.dynamic_rotate %24 by %c3_i32_17 dim 1 : vector<16x128xf32>, i32 -> vector<16x128xf32>
      %c3_i32_18 = arith.constant 3 : i32
      %31 = vector.broadcast %c3_i32_18 : i32 to vector<16x128xi32>
      %32 = arith.cmpi sge, %27, %31 : vector<16x128xi32>
      %33 = arith.select %32, %30, %29 : vector<16x128xi1>, vector<16x128xf32>
      %34 = arith.cmpf ogt, %33, %24 : vector<16x128xf32>
      %35 = arith.cmpf oeq, %33, %24 : vector<16x128xf32>
      %36 = arith.andi %35, %32 : vector<16x128xi1>
      %37 = arith.ori %34, %36 : vector<16x128xi1>
      %38 = arith.extui %37 : vector<16x128xi1> to vector<16x128xi32>
      %39 = arith.addi %28, %38 : vector<16x128xi32>
      %c126_i32 = arith.constant 126 : i32
      %40 = tpu.dynamic_rotate %24 by %c126_i32 dim 1 : vector<16x128xf32>, i32 -> vector<16x128xf32>
      %c2_i32 = arith.constant 2 : i32
      %41 = tpu.dynamic_rotate %24 by %c2_i32 dim 1 : vector<16x128xf32>, i32 -> vector<16x128xf32>
      %c2_i32_19 = arith.constant 2 : i32
      %42 = vector.broadcast %c2_i32_19 : i32 to vector<16x128xi32>
      %43 = arith.cmpi sge, %27, %42 : vector<16x128xi32>
      %44 = arith.select %43, %41, %40 : vector<16x128xi1>, vector<16x128xf32>
      %45 = arith.cmpf ogt, %44, %24 : vector<16x128xf32>
      %46 = arith.cmpf oeq, %44, %24 : vector<16x128xf32>
      %47 = arith.andi %46, %43 : vector<16x128xi1>
      %48 = arith.ori %45, %47 : vector<16x128xi1>
      %49 = arith.extui %48 : vector<16x128xi1> to vector<16x128xi32>
      %50 = arith.addi %39, %49 : vector<16x128xi32>
      %c125_i32 = arith.constant 125 : i32
      %51 = tpu.dynamic_rotate %24 by %c125_i32 dim 1 : vector<16x128xf32>, i32 -> vector<16x128xf32>
      %c1_i32 = arith.constant 1 : i32
      %52 = tpu.dynamic_rotate %24 by %c1_i32 dim 1 : vector<16x128xf32>, i32 -> vector<16x128xf32>
      %c1_i32_20 = arith.constant 1 : i32
      %53 = vector.broadcast %c1_i32_20 : i32 to vector<16x128xi32>
      %54 = arith.cmpi sge, %27, %53 : vector<16x128xi32>
      %55 = arith.select %54, %52, %51 : vector<16x128xi1>, vector<16x128xf32>
      %56 = arith.cmpf ogt, %55, %24 : vector<16x128xf32>
      %57 = arith.cmpf oeq, %55, %24 : vector<16x128xf32>
      %58 = arith.andi %57, %54 : vector<16x128xi1>
      %59 = arith.ori %56, %58 : vector<16x128xi1>
      %60 = arith.extui %59 : vector<16x128xi1> to vector<16x128xi32>
      %61 = arith.addi %50, %60 : vector<16x128xi32>
      %c2_i32_21 = arith.constant 2 : i32
      %62 = vector.broadcast %c2_i32_21 : i32 to vector<16x128xi32>
      %63 = arith.cmpi slt, %61, %62 : vector<16x128xi32>
      %cst_22 = arith.constant 0.000000e+00 : f32
      %64 = vector.broadcast %cst_22 : f32 to vector<16x128xf32>
      %65 = arith.select %63, %24, %64 : vector<16x128xi1>, vector<16x128xf32>
      %cst_23 = arith.constant dense<0xFF800000> : vector<16xf32>
      %66 = vector.multi_reduction <maximumf>, %65, %cst_23 [1] : vector<16x128xf32> to vector<16xf32>
      %67 = vector.shape_cast %66 : vector<16xf32> to vector<16x1xf32>
      %cst_24 = arith.constant 9.99999996E-13 : f32
      %68 = vector.broadcast %cst_24 : f32 to vector<16x1xf32>
      %69 = arith.maximumf %67, %68 : vector<16x1xf32>
      %cst_25 = arith.constant 4.480000e+02 : f32
      %70 = vector.broadcast %cst_25 : f32 to vector<16x1xf32>
      %71 = arith.divf %70, %69 : vector<16x1xf32>
      %72 = vector.broadcast %71 : vector<16x1xf32> to vector<16x128xf32>
      %73 = arith.mulf %65, %72 : vector<16x128xf32>
      %cst_26 = arith.constant 0.000000e+00 : f32
      %cst_27 = arith.constant 4.480000e+02 : f32
      %74 = vector.broadcast %cst_26 : f32 to vector<16x128xf32>
      %75 = arith.maximumf %74, %73 : vector<16x128xf32>
      %76 = vector.broadcast %cst_27 : f32 to vector<16x128xf32>
      %77 = arith.minimumf %76, %75 : vector<16x128xf32>
      %78 = tpu.bitcast %77 : vector<16x128xf32> -> vector<16x128xi32>
      %c20_i32 = arith.constant 20 : i32
      %79 = vector.broadcast %c20_i32 : i32 to vector<16x128xi32>
      %80 = arith.shrsi %78, %79 : vector<16x128xi32>
      %c1_i32_28 = arith.constant 1 : i32
      %81 = vector.broadcast %c1_i32_28 : i32 to vector<16x128xi32>
      %82 = arith.andi %80, %81 : vector<16x128xi32>
      %83 = arith.addi %78, %82 : vector<16x128xi32>
      %c524287_i32 = arith.constant 524287 : i32
      %84 = vector.broadcast %c524287_i32 : i32 to vector<16x128xi32>
      %85 = arith.addi %83, %84 : vector<16x128xi32>
      %c-1048576_i32 = arith.constant -1048576 : i32
      %86 = vector.broadcast %c-1048576_i32 : i32 to vector<16x128xi32>
      %87 = arith.andi %85, %86 : vector<16x128xi32>
      %88 = tpu.bitcast %87 : vector<16x128xi32> -> vector<16x128xf32>
      %89 = arith.truncf %88 : vector<16x128xf32> to vector<16x128xbf16>
      %c0_29 = arith.constant 0 : index
      %c0_30 = arith.constant 0 : index
      %c0_31 = arith.constant 0 : index
      %90 = vector.load %arg7[%c0_29, %c0_30, %c0_31] : memref<1x16x128xbf16, #tpu.memory_space<vmem>>, vector<1x16x128xbf16>
      %91 = vector.shape_cast %90 : vector<1x16x128xbf16> to vector<16x128xbf16>
      %92 = vector.shape_cast %89 : vector<16x128xbf16> to vector<1x16x128xbf16>
      tpu.vector_store %arg7[%c0_29, %c0_30, %c0_31], %92 {strides = array<i32>} : memref<1x16x128xbf16, #tpu.memory_space<vmem>>, vector<1x16x128xbf16>,
      %cst_32 = arith.constant 0.00223214296 : f32
      %93 = vector.broadcast %cst_32 : f32 to vector<16x1xf32>
      %94 = arith.mulf %69, %93 : vector<16x1xf32>
      %c0_33 = arith.constant 0 : index
      %c0_34 = arith.constant 0 : index
      %95 = vector.load %arg8[%c0_33, %c0_34] : memref<16x1xf32, #tpu.memory_space<vmem>>, vector<16x1xf32>
      tpu.vector_store %arg8[%c0_33, %c0_34], %94 {strides = array<i32>} : memref<16x1xf32, #tpu.memory_space<vmem>>, vector<16x1xf32>,
    } else {
    }
    %c0_i32_2 = arith.constant 0 : i32
    %5 = arith.cmpi eq, %arg2, %c0_i32_2 : i32
    %6 = arith.extui %5 : i1 to i32
    %c0_i32_3 = arith.constant 0 : i32
    %7 = arith.cmpi ne, %6, %c0_i32_3 : i32
    scf.if %7 {
      %cst_13 = arith.constant 0.000000e+00 : f32
      %20 = vector.broadcast %cst_13 : f32 to vector<16x128xf32>
      %c0_14 = arith.constant 0 : index
      %c0_15 = arith.constant 0 : index
      %21 = vector.load %arg9[%c0_14, %c0_15] : memref<16x128xf32, #tpu.memory_space<vmem>>, vector<16x128xf32>
      tpu.vector_store %arg9[%c0_14, %c0_15], %20 {strides = array<i32>} : memref<16x128xf32, #tpu.memory_space<vmem>>, vector<16x128xf32>,
    } else {
    }
    %8 = arith.index_cast %arg2 : i32 to index
    %c0 = arith.constant 0 : index
    %c0_4 = arith.constant 0 : index
    %9 = vector.load %arg7[%8, %c0, %c0_4] : memref<1x16x128xbf16, #tpu.memory_space<vmem>>, vector<1x16x128xbf16>
    %10 = vector.shape_cast %9 : vector<1x16x128xbf16> to vector<16x128xbf16>
    %c0_5 = arith.constant 0 : index
    %c0_6 = arith.constant 0 : index
    %11 = vector.load %arg4[%c0_5, %c0_6] : memref<128x128xf8E4M3FN, #tpu.memory_space<vmem>>, vector<128x128xf8E4M3FN>
    %12 = arith.extf %11 : vector<128x128xf8E4M3FN> to vector<128x128xbf16>
    %c0_7 = arith.constant 0 : index
    %c0_8 = arith.constant 0 : index
    %13 = vector.load %arg9[%c0_7, %c0_8] : memref<16x128xf32, #tpu.memory_space<vmem>>, vector<16x128xf32>
    %cst = arith.constant dense<0.000000e+00> : vector<16x128xf32>
    %14 = tpu.matmul %10, %12, %cst {dimension_numbers = #tpu.dot_dimension_numbers<[1], [0], [0], [1], [0, 0, 1, 1], [], []>} : vector<16x128xbf16>, vector<128x128xbf16>, vector<16x128xf32> -> vector<16x128xf32>
    %15 = arith.addf %13, %14 : vector<16x128xf32>
    %c0_9 = arith.constant 0 : index
    %c0_10 = arith.constant 0 : index
    %16 = vector.load %arg9[%c0_9, %c0_10] : memref<16x128xf32, #tpu.memory_space<vmem>>, vector<16x128xf32>
    tpu.vector_store %arg9[%c0_9, %c0_10], %15 {strides = array<i32>} : memref<16x128xf32, #tpu.memory_space<vmem>>, vector<16x128xf32>,
    %c0_i32_11 = arith.constant 0 : i32
    %17 = arith.cmpi eq, %arg2, %c0_i32_11 : i32
    %18 = arith.extui %17 : i1 to i32
    %c0_i32_12 = arith.constant 0 : i32
    %19 = arith.cmpi ne, %18, %c0_i32_12 : i32
    scf.if %19 {
      %c0_13 = arith.constant 0 : index
      %c0_14 = arith.constant 0 : index
      %20 = vector.load %arg9[%c0_13, %c0_14] : memref<16x128xf32, #tpu.memory_space<vmem>>, vector<16x128xf32>
      %c0_15 = arith.constant 0 : index
      %c0_16 = arith.constant 0 : index
      %21 = vector.load %arg8[%c0_15, %c0_16] : memref<16x1xf32, #tpu.memory_space<vmem>>, vector<16x1xf32>
      %22 = vector.broadcast %21 : vector<16x1xf32> to vector<16x128xf32>
      %23 = arith.mulf %20, %22 : vector<16x128xf32>
      %c0_17 = arith.constant 0 : index
      %c0_18 = arith.constant 0 : index
      %24 = vector.load %arg5[%c0_17, %c0_18] : memref<1x128xf32, #tpu.memory_space<vmem>>, vector<1x128xf32>
      %25 = vector.broadcast %24 : vector<1x128xf32> to vector<16x128xf32>
      %26 = arith.mulf %23, %25 : vector<16x128xf32>
      %27 = arith.truncf %26 : vector<16x128xf32> to vector<16x128xbf16>
      %c0_19 = arith.constant 0 : index
      %c0_20 = arith.constant 0 : index
      %28 = vector.load %arg6[%c0_19, %c0_20] : memref<16x128xbf16, #tpu.memory_space<vmem>>, vector<16x128xbf16>
      tpu.vector_store %arg6[%c0_19, %c0_20], %27 {strides = array<i32>} : memref<16x128xbf16, #tpu.memory_space<vmem>>, vector<16x128xbf16>,
    } else {
    }
    return
  }
  func.func @transform_0(%arg0: i32, %arg1: i32, %arg2: i32) -> (i32, i32) {
    %c0_i32 = arith.constant 0 : i32
    %c0_i32_0 = arith.constant 0 : i32
    return %arg0, %c0_i32 : i32, i32
  }
  func.func @transform_1(%arg0: i32, %arg1: i32, %arg2: i32) -> (i32, i32) {
    %c0_i32 = arith.constant 0 : i32
    return %arg2, %arg1 : i32, i32
  }
  func.func @transform_2(%arg0: i32, %arg1: i32, %arg2: i32) -> (i32, i32) {
    %c0_i32 = arith.constant 0 : i32
    %c0_i32_0 = arith.constant 0 : i32
    return %c0_i32, %arg1 : i32, i32
  }
  func.func @transform_3(%arg0: i32, %arg1: i32, %arg2: i32) -> (i32, i32) {
    %c0_i32 = arith.constant 0 : i32
    return %arg0, %arg1 : i32, i32
  }
}

module attributes {stable_mosaic.version = 11 : i64} {
  func.func @_fused_srelu_sp24_fp8_linear_kernel(%arg0: i32, %arg1: i32, %arg2: i32, %arg3: memref<16x128xbf16, #tpu.memory_space<vmem>>, %arg4: memref<128x128xbf16, #tpu.memory_space<vmem>>, %arg5: memref<1x128xf32, #tpu.memory_space<vmem>>, %arg6: memref<16x128xbf16, #tpu.memory_space<vmem>>, %arg7: memref<1x16x128xbf16, #tpu.memory_space<vmem>>, %arg8: memref<16x1xf32, #tpu.memory_space<vmem>>, %arg9: memref<16x128xf32, #tpu.memory_space<vmem>>) attributes {dimension_semantics = [#tpu.dimension_semantics<parallel>, #tpu.dimension_semantics<arbitrary>, #tpu.dimension_semantics<arbitrary>], iteration_bounds = array<i64: 1, 1, 1>, scalar_prefetch = 0 : i64, scratch_operands = 3 : i64, tpu.core_type = #tpu.core_type<tc>, window_params = [{transform_indices = @transform_0, window_bounds = array<i64: 16, 128>}, {transform_indices = @transform_1, window_bounds = array<i64: 128, 128>}, {transform_indices = @transform_2, window_bounds = array<i64: 1, 128>}, {transform_indices = @transform_3, window_bounds = array<i64: 16, 128>}]} {
    %c0_i32 = arith.constant 0 : i32
    %0 = arith.cmpi eq, %arg1, %c0_i32 : i32
    %c0_i32_0 = arith.constant 0 : i32
    %1 = arith.cmpi eq, %arg2, %c0_i32_0 : i32
    %2 = arith.andi %0, %1 : i1
    %3 = arith.extui %2 : i1 to i32
    %c0_i32_1 = arith.constant 0 : i32
    %4 = arith.cmpi ne, %3, %c0_i32_1 : i32
    scf.if %4 {
      %c0_13 = arith.constant 0 : index
      %c0_14 = arith.constant 0 : index
      %19 = vector.load %arg3[%c0_13, %c0_14] : memref<16x128xbf16, #tpu.memory_space<vmem>>, vector<16x128xbf16>
      %20 = arith.extf %19 : vector<16x128xbf16> to vector<16x128xf32>
      %cst_15 = arith.constant 0.000000e+00 : f32
      %21 = vector.broadcast %cst_15 : f32 to vector<16x128xf32>
      %22 = arith.maximumf %20, %21 : vector<16x128xf32>
      %23 = arith.mulf %22, %22 : vector<16x128xf32>
      %24 = tpu.iota {dimensions = array<i32: 1>} : vector<16x128xi32>
      %c3_i32 = arith.constant 3 : i32
      %25 = vector.broadcast %c3_i32 : i32 to vector<16x128xi32>
      %26 = arith.andi %24, %25 : vector<16x128xi32>
      %c0_i32_16 = arith.constant 0 : i32
      %27 = vector.broadcast %c0_i32_16 : i32 to vector<16x128xi32>
      %c127_i32 = arith.constant 127 : i32
      %28 = tpu.dynamic_rotate %23 by %c127_i32 dim 1 : vector<16x128xf32>, i32 -> vector<16x128xf32>
      %c3_i32_17 = arith.constant 3 : i32
      %29 = tpu.dynamic_rotate %23 by %c3_i32_17 dim 1 : vector<16x128xf32>, i32 -> vector<16x128xf32>
      %c3_i32_18 = arith.constant 3 : i32
      %30 = vector.broadcast %c3_i32_18 : i32 to vector<16x128xi32>
      %31 = arith.cmpi sge, %26, %30 : vector<16x128xi32>
      %32 = arith.select %31, %29, %28 : vector<16x128xi1>, vector<16x128xf32>
      %33 = arith.cmpf ogt, %32, %23 : vector<16x128xf32>
      %34 = arith.cmpf oeq, %32, %23 : vector<16x128xf32>
      %35 = arith.andi %34, %31 : vector<16x128xi1>
      %36 = arith.ori %33, %35 : vector<16x128xi1>
      %37 = arith.extui %36 : vector<16x128xi1> to vector<16x128xi32>
      %38 = arith.addi %27, %37 : vector<16x128xi32>
      %c126_i32 = arith.constant 126 : i32
      %39 = tpu.dynamic_rotate %23 by %c126_i32 dim 1 : vector<16x128xf32>, i32 -> vector<16x128xf32>
      %c2_i32 = arith.constant 2 : i32
      %40 = tpu.dynamic_rotate %23 by %c2_i32 dim 1 : vector<16x128xf32>, i32 -> vector<16x128xf32>
      %c2_i32_19 = arith.constant 2 : i32
      %41 = vector.broadcast %c2_i32_19 : i32 to vector<16x128xi32>
      %42 = arith.cmpi sge, %26, %41 : vector<16x128xi32>
      %43 = arith.select %42, %40, %39 : vector<16x128xi1>, vector<16x128xf32>
      %44 = arith.cmpf ogt, %43, %23 : vector<16x128xf32>
      %45 = arith.cmpf oeq, %43, %23 : vector<16x128xf32>
      %46 = arith.andi %45, %42 : vector<16x128xi1>
      %47 = arith.ori %44, %46 : vector<16x128xi1>
      %48 = arith.extui %47 : vector<16x128xi1> to vector<16x128xi32>
      %49 = arith.addi %38, %48 : vector<16x128xi32>
      %c125_i32 = arith.constant 125 : i32
      %50 = tpu.dynamic_rotate %23 by %c125_i32 dim 1 : vector<16x128xf32>, i32 -> vector<16x128xf32>
      %c1_i32 = arith.constant 1 : i32
      %51 = tpu.dynamic_rotate %23 by %c1_i32 dim 1 : vector<16x128xf32>, i32 -> vector<16x128xf32>
      %c1_i32_20 = arith.constant 1 : i32
      %52 = vector.broadcast %c1_i32_20 : i32 to vector<16x128xi32>
      %53 = arith.cmpi sge, %26, %52 : vector<16x128xi32>
      %54 = arith.select %53, %51, %50 : vector<16x128xi1>, vector<16x128xf32>
      %55 = arith.cmpf ogt, %54, %23 : vector<16x128xf32>
      %56 = arith.cmpf oeq, %54, %23 : vector<16x128xf32>
      %57 = arith.andi %56, %53 : vector<16x128xi1>
      %58 = arith.ori %55, %57 : vector<16x128xi1>
      %59 = arith.extui %58 : vector<16x128xi1> to vector<16x128xi32>
      %60 = arith.addi %49, %59 : vector<16x128xi32>
      %c2_i32_21 = arith.constant 2 : i32
      %61 = vector.broadcast %c2_i32_21 : i32 to vector<16x128xi32>
      %62 = arith.cmpi slt, %60, %61 : vector<16x128xi32>
      %cst_22 = arith.constant 0.000000e+00 : f32
      %63 = vector.broadcast %cst_22 : f32 to vector<16x128xf32>
      %64 = arith.select %62, %23, %63 : vector<16x128xi1>, vector<16x128xf32>
      %cst_23 = arith.constant dense<0xFF800000> : vector<16xf32>
      %65 = vector.multi_reduction <maximumf>, %64, %cst_23 [1] : vector<16x128xf32> to vector<16xf32>
      %66 = vector.shape_cast %65 : vector<16xf32> to vector<16x1xf32>
      %cst_24 = arith.constant 9.99999996E-13 : f32
      %67 = vector.broadcast %cst_24 : f32 to vector<16x1xf32>
      %68 = arith.maximumf %66, %67 : vector<16x1xf32>
      %cst_25 = arith.constant 4.480000e+02 : f32
      %69 = vector.broadcast %cst_25 : f32 to vector<16x1xf32>
      %70 = arith.divf %69, %68 : vector<16x1xf32>
      %71 = vector.broadcast %70 : vector<16x1xf32> to vector<16x128xf32>
      %72 = arith.mulf %64, %71 : vector<16x128xf32>
      %cst_26 = arith.constant 0.000000e+00 : f32
      %cst_27 = arith.constant 4.480000e+02 : f32
      %73 = vector.broadcast %cst_26 : f32 to vector<16x128xf32>
      %74 = arith.maximumf %73, %72 : vector<16x128xf32>
      %75 = vector.broadcast %cst_27 : f32 to vector<16x128xf32>
      %76 = arith.minimumf %75, %74 : vector<16x128xf32>
      %77 = tpu.bitcast %76 : vector<16x128xf32> -> vector<16x128xi32>
      %c20_i32 = arith.constant 20 : i32
      %78 = vector.broadcast %c20_i32 : i32 to vector<16x128xi32>
      %79 = arith.shrsi %77, %78 : vector<16x128xi32>
      %c1_i32_28 = arith.constant 1 : i32
      %80 = vector.broadcast %c1_i32_28 : i32 to vector<16x128xi32>
      %81 = arith.andi %79, %80 : vector<16x128xi32>
      %82 = arith.addi %77, %81 : vector<16x128xi32>
      %c524287_i32 = arith.constant 524287 : i32
      %83 = vector.broadcast %c524287_i32 : i32 to vector<16x128xi32>
      %84 = arith.addi %82, %83 : vector<16x128xi32>
      %c-1048576_i32 = arith.constant -1048576 : i32
      %85 = vector.broadcast %c-1048576_i32 : i32 to vector<16x128xi32>
      %86 = arith.andi %84, %85 : vector<16x128xi32>
      %87 = tpu.bitcast %86 : vector<16x128xi32> -> vector<16x128xf32>
      %88 = arith.truncf %87 : vector<16x128xf32> to vector<16x128xbf16>
      %c0_29 = arith.constant 0 : index
      %c0_30 = arith.constant 0 : index
      %c0_31 = arith.constant 0 : index
      %89 = vector.load %arg7[%c0_29, %c0_30, %c0_31] : memref<1x16x128xbf16, #tpu.memory_space<vmem>>, vector<1x16x128xbf16>
      %90 = vector.shape_cast %89 : vector<1x16x128xbf16> to vector<16x128xbf16>
      %91 = vector.shape_cast %88 : vector<16x128xbf16> to vector<1x16x128xbf16>
      tpu.vector_store %arg7[%c0_29, %c0_30, %c0_31], %91 {strides = array<i32>} : memref<1x16x128xbf16, #tpu.memory_space<vmem>>, vector<1x16x128xbf16>,
      %cst_32 = arith.constant 0.00223214296 : f32
      %92 = vector.broadcast %cst_32 : f32 to vector<16x1xf32>
      %93 = arith.mulf %68, %92 : vector<16x1xf32>
      %c0_33 = arith.constant 0 : index
      %c0_34 = arith.constant 0 : index
      %94 = vector.load %arg8[%c0_33, %c0_34] : memref<16x1xf32, #tpu.memory_space<vmem>>, vector<16x1xf32>
      tpu.vector_store %arg8[%c0_33, %c0_34], %93 {strides = array<i32>} : memref<16x1xf32, #tpu.memory_space<vmem>>, vector<16x1xf32>,
    } else {
    }
    %c0_i32_2 = arith.constant 0 : i32
    %5 = arith.cmpi eq, %arg2, %c0_i32_2 : i32
    %6 = arith.extui %5 : i1 to i32
    %c0_i32_3 = arith.constant 0 : i32
    %7 = arith.cmpi ne, %6, %c0_i32_3 : i32
    scf.if %7 {
      %cst_13 = arith.constant 0.000000e+00 : f32
      %19 = vector.broadcast %cst_13 : f32 to vector<16x128xf32>
      %c0_14 = arith.constant 0 : index
      %c0_15 = arith.constant 0 : index
      %20 = vector.load %arg9[%c0_14, %c0_15] : memref<16x128xf32, #tpu.memory_space<vmem>>, vector<16x128xf32>
      tpu.vector_store %arg9[%c0_14, %c0_15], %19 {strides = array<i32>} : memref<16x128xf32, #tpu.memory_space<vmem>>, vector<16x128xf32>,
    } else {
    }
    %8 = arith.index_cast %arg2 : i32 to index
    %c0 = arith.constant 0 : index
    %c0_4 = arith.constant 0 : index
    %9 = vector.load %arg7[%8, %c0, %c0_4] : memref<1x16x128xbf16, #tpu.memory_space<vmem>>, vector<1x16x128xbf16>
    %10 = vector.shape_cast %9 : vector<1x16x128xbf16> to vector<16x128xbf16>
    %c0_5 = arith.constant 0 : index
    %c0_6 = arith.constant 0 : index
    %11 = vector.load %arg4[%c0_5, %c0_6] : memref<128x128xbf16, #tpu.memory_space<vmem>>, vector<128x128xbf16>
    %c0_7 = arith.constant 0 : index
    %c0_8 = arith.constant 0 : index
    %12 = vector.load %arg9[%c0_7, %c0_8] : memref<16x128xf32, #tpu.memory_space<vmem>>, vector<16x128xf32>
    %cst = arith.constant dense<0.000000e+00> : vector<16x128xf32>
    %13 = tpu.matmul %10, %11, %cst {dimension_numbers = #tpu.dot_dimension_numbers<[1], [0], [0], [1], [0, 0, 1, 1], [], []>} : vector<16x128xbf16>, vector<128x128xbf16>, vector<16x128xf32> -> vector<16x128xf32>
    %14 = arith.addf %12, %13 : vector<16x128xf32>
    %c0_9 = arith.constant 0 : index
    %c0_10 = arith.constant 0 : index
    %15 = vector.load %arg9[%c0_9, %c0_10] : memref<16x128xf32, #tpu.memory_space<vmem>>, vector<16x128xf32>
    tpu.vector_store %arg9[%c0_9, %c0_10], %14 {strides = array<i32>} : memref<16x128xf32, #tpu.memory_space<vmem>>, vector<16x128xf32>,
    %c0_i32_11 = arith.constant 0 : i32
    %16 = arith.cmpi eq, %arg2, %c0_i32_11 : i32
    %17 = arith.extui %16 : i1 to i32
    %c0_i32_12 = arith.constant 0 : i32
    %18 = arith.cmpi ne, %17, %c0_i32_12 : i32
    scf.if %18 {
      %c0_13 = arith.constant 0 : index
      %c0_14 = arith.constant 0 : index
      %19 = vector.load %arg9[%c0_13, %c0_14] : memref<16x128xf32, #tpu.memory_space<vmem>>, vector<16x128xf32>
      %c0_15 = arith.constant 0 : index
      %c0_16 = arith.constant 0 : index
      %20 = vector.load %arg8[%c0_15, %c0_16] : memref<16x1xf32, #tpu.memory_space<vmem>>, vector<16x1xf32>
      %21 = vector.broadcast %20 : vector<16x1xf32> to vector<16x128xf32>
      %22 = arith.mulf %19, %21 : vector<16x128xf32>
      %c0_17 = arith.constant 0 : index
      %c0_18 = arith.constant 0 : index
      %23 = vector.load %arg5[%c0_17, %c0_18] : memref<1x128xf32, #tpu.memory_space<vmem>>, vector<1x128xf32>
      %24 = vector.broadcast %23 : vector<1x128xf32> to vector<16x128xf32>
      %25 = arith.mulf %22, %24 : vector<16x128xf32>
      %26 = arith.truncf %25 : vector<16x128xf32> to vector<16x128xbf16>
      %c0_19 = arith.constant 0 : index
      %c0_20 = arith.constant 0 : index
      %27 = vector.load %arg6[%c0_19, %c0_20] : memref<16x128xbf16, #tpu.memory_space<vmem>>, vector<16x128xbf16>
      tpu.vector_store %arg6[%c0_19, %c0_20], %26 {strides = array<i32>} : memref<16x128xbf16, #tpu.memory_space<vmem>>, vector<16x128xbf16>,
    } else {
    }
    return
  }
  func.func @transform_0(%arg0: i32, %arg1: i32, %arg2: i32) -> (i32, i32) {
    %c0_i32 = arith.constant 0 : i32
    %c0_i32_0 = arith.constant 0 : i32
    return %arg0, %c0_i32 : i32, i32
  }
  func.func @transform_1(%arg0: i32, %arg1: i32, %arg2: i32) -> (i32, i32) {
    %c0_i32 = arith.constant 0 : i32
    return %arg2, %arg1 : i32, i32
  }
  func.func @transform_2(%arg0: i32, %arg1: i32, %arg2: i32) -> (i32, i32) {
    %c0_i32 = arith.constant 0 : i32
    %c0_i32_0 = arith.constant 0 : i32
    return %c0_i32, %arg1 : i32, i32
  }
  func.func @transform_3(%arg0: i32, %arg1: i32, %arg2: i32) -> (i32, i32) {
    %c0_i32 = arith.constant 0 : i32
    return %arg0, %arg1 : i32, i32
  }
}

</mosaic_0001>

<llo_original>
// kernel: fp8_semi_sparse_activation_linear.1
$region0: #{fp8_semi_sparse_activation_linear.1}
  #allocation0 [shape = 'u32[]', space=smem, size = 0x4, offset = 0x4, fixed_abs, tag = 'smem constant byte address 0x4 - core index']
  #allocation1 [shape = 'u32[144,128]{1,0:T(1,128)}', space=vmem, size = 0x12000, scoped, tag = 'internal scratch']
  #allocation2 [shape = 'bf16[1,16,128]{2,1,0:T(16,128)(2,1)}', space=vmem, size = 0x1000, scoped, tag = 'scratch operand']
  #allocation3 [shape = 'f32[16,1]{1,0:T(8,128)}', space=vmem, size = 0x2000, scoped, tag = 'scratch operand']
  #allocation4 [shape = 'f32[16,128]{1,0:T(8,128)}', space=vmem, size = 0x2000, scoped, tag = 'scratch operand']
  %s0 = inlined_call_operand.vmem [shape: bf16[16,128], index: 0, kind: input, shape index: {}]
  %s1 = inlined_call_operand.vmem [shape: f8e4m3fn[128,128], index: 1, kind: input, shape index: {}]
  %s2 = inlined_call_operand.vmem [shape: f32[1,128], index: 2, kind: input, shape index: {}]
  %s3 = inlined_call_operand.hbm [shape: bf16[16,128], index: 3, kind: output, shape index: {}]
  %s4 = sld [smem:[#allocation0]]
  $region34: #{fp8_semi_sparse_activation_linear.1} parent=0
    _
  %s6 = ssub.s32 1, %s4
  %s7 = scalar_select 0, %s6, %s4
  $region1: #{fp8_semi_sparse_activation_linear.1} parent=0
    #allocation5 [shape = 'u8[4096]{0}', space=vmem, size = 0x1000, scoped, tag = 'output window, operand 0, single buffered']
    #allocation6 [shape = 's32[1]{0}', space=sflag, size = 0x4, scoped, tag = 'scoped memory for fp8_semi_sparse_activation_linear.1']
    %8 = vsyncpa [#allocation6], 0
    // Predicated region
    $region2: #{fp8_semi_sparse_activation_linear.1} parent=1 // pred_check
      _
    $region3: #{fp8_semi_sparse_activation_linear.1} parent=1 // pred_check_branch
      %10 = sbr.rel (0) target = $region5
    $region4: #{fp8_semi_sparse_activation_linear.1} parent=1 // pred_region
      _
    $region5: #{fp8_semi_sparse_activation_linear.1} parent=1 // pred_fallthru
      _
    // Predicated region
    $region6: #{fp8_semi_sparse_activation_linear.1} parent=1 // pred_check
      _
    $region7: #{fp8_semi_sparse_activation_linear.1} parent=1 // pred_check_branch
      %12 = sbr.rel (0) target = $region9
    $region8: #{fp8_semi_sparse_activation_linear.1} parent=1 // pred_region
      _
    $region9: #{fp8_semi_sparse_activation_linear.1} parent=1 // pred_fallthru
      _
    // Predicated region
    $region10: #{fp8_semi_sparse_activation_linear.1} parent=1 // pred_check
      _
    $region11: #{fp8_semi_sparse_activation_linear.1} parent=1 // pred_check_branch
      %14 = sbr.rel (0) target = $region13
    $region12: #{fp8_semi_sparse_activation_linear.1} parent=1 // pred_region
      _
    $region13: #{fp8_semi_sparse_activation_linear.1} parent=1 // pred_fallthru
      _
    %p16 = scmp.eq.s32.totalorder 0, 0
    %p17 = scmp.eq.s32.totalorder 0, 0
    %p18 = pnand %p16, %p17
    %p19 = pneg %p18
    // Predicated region
    $region14: #{fp8_semi_sparse_activation_linear.1} parent=1 // pred_check
      _
    $region15: #{fp8_semi_sparse_activation_linear.1} parent=1 // pred_check_branch
      %21 = sbr.rel (%p18) target = $region17
    $region16: #{fp8_semi_sparse_activation_linear.1} parent=1 // pred_region
      %v22 = vld [vmem:[%s0] sm:$0xf]
      %v23 = vld [vmem:[%s0 + $0x4] sm:$0xf]
      %v24 = vunpack.c.l.bf16 %v22
      %v25 = vunpack.c.l.bf16 %v23
      %v26 = vmax.f32 %v24, 0.0
      %v27 = vmax.f32 %v25, 0.0
      %v28 = vmul.f32 %v26, %v26
      %v29 = vmul.f32 %v27, %v27
      %v30 = vlaneseq
      %v31 = vand.u32 %v30, 127
      %v32 = vand.u32 %v31, 3
      %33 = vrot.lane.b32.xlu0 %v28, 127
      %v34 = vpop.permute.xlu0 %33
      %35 = vrot.lane.b32.xlu0 %v29, 127
      %v36 = vpop.permute.xlu0 %35
      %37 = vrot.lane.b32.xlu0 %v28, 3
      %v38 = vpop.permute.xlu0 %37
      %39 = vrot.lane.b32.xlu0 %v29, 3
      %v40 = vpop.permute.xlu0 %39
      %vm41 = vcmp.ge.s32.totalorder %v32, 3
      %v42 = vsel %vm41, %v38, %v34
      %v43 = vsel %vm41, %v40, %v36
      %vm44 = vcmp.gt.f32.partialorder %v42, %v28
      %vm45 = vcmp.gt.f32.partialorder %v43, %v29
      %vm46 = vcmp.eq.f32.partialorder %v42, %v28
      %vm47 = vcmp.eq.f32.partialorder %v43, %v29
      %vm48 = vmand %vm46, %vm41
      %vm49 = vmand %vm47, %vm41
      %vm50 = vmor %vm44, %vm48
      %vm51 = vmor %vm45, %vm49
      %v52 = vsel %vm50, 1, 0
      %v53 = vsel %vm51, 1, 0
      %54 = vrot.lane.b32.xlu0 %v28, 126
      %v55 = vpop.permute.xlu0 %54
      %56 = vrot.lane.b32.xlu0 %v29, 126
      %v57 = vpop.permute.xlu0 %56
      %58 = vrot.lane.b32.xlu0 %v28, 2
      %v59 = vpop.permute.xlu0 %58
      %60 = vrot.lane.b32.xlu0 %v29, 2
      %v61 = vpop.permute.xlu0 %60
      %vm62 = vcmp.ge.s32.totalorder %v32, 2
      %v63 = vsel %vm62, %v59, %v55
      %v64 = vsel %vm62, %v61, %v57
      %vm65 = vcmp.gt.f32.partialorder %v63, %v28
      %vm66 = vcmp.gt.f32.partialorder %v64, %v29
      %vm67 = vcmp.eq.f32.partialorder %v63, %v28
      %vm68 = vcmp.eq.f32.partialorder %v64, %v29
      %vm69 = vmand %vm67, %vm62
      %vm70 = vmand %vm68, %vm62
      %vm71 = vmor %vm65, %vm69
      %vm72 = vmor %vm66, %vm70
      %v73 = vsel %vm71, 1, 0
      %v74 = vsel %vm72, 1, 0
      %v75 = vadd.s32 %v52, %v73
      %v76 = vadd.s32 %v53, %v74
      %77 = vrot.lane.b32.xlu0 %v28, 125
      %v78 = vpop.permute.xlu0 %77
      %79 = vrot.lane.b32.xlu0 %v29, 125
      %v80 = vpop.permute.xlu0 %79
      %81 = vrot.lane.b32.xlu0 %v28, 1
      %v82 = vpop.permute.xlu0 %81
      %83 = vrot.lane.b32.xlu0 %v29, 1
      %v84 = vpop.permute.xlu0 %83
      %vm85 = vcmp.ge.s32.totalorder %v32, 1
      %v86 = vsel %vm85, %v82, %v78
      %v87 = vsel %vm85, %v84, %v80
      %vm88 = vcmp.gt.f32.partialorder %v86, %v28
      %vm89 = vcmp.gt.f32.partialorder %v87, %v29
      %vm90 = vcmp.eq.f32.partialorder %v86, %v28
      %vm91 = vcmp.eq.f32.partialorder %v87, %v29
      %vm92 = vmand %vm90, %vm85
      %vm93 = vmand %vm91, %vm85
      %vm94 = vmor %vm88, %vm92
      %vm95 = vmor %vm89, %vm93
      %v96 = vsel %vm94, 1, 0
      %v97 = vsel %vm95, 1, 0
      %v98 = vadd.s32 %v75, %v96
      %v99 = vadd.s32 %v76, %v97
      %vm100 = vcmp.lt.s32.totalorder %v98, 2
      %vm101 = vcmp.lt.s32.totalorder %v99, 2
      %v102 = vsel %vm100, %v28, 0.0
      %v103 = vsel %vm101, %v29, 0.0
      %104 = vmax.xlane.f32.xlu0 %v102
      %v105 = vpop.xlane.xlu0 %104
      %106 = vmax.xlane.f32.xlu0 %v103
      %v107 = vpop.xlane.xlu0 %106
      %v108 = vmax.f32 %v105, 1e-12
      %v109 = vmax.f32 %v107, 1e-12
      %v110 = vrcp.pop %v108
      %v111 = vmul.f32 448.0, %v110
      %v112 = vrcp.pop %v109
      %v113 = vmul.f32 448.0, %v112
      %v114 = vmul.f32 %v102, %v111
      %v115 = vmul.f32 %v103, %v113
      %v116 = vmax.f32 %v114, 0.0
      %v117 = vmax.f32 %v115, 0.0
      %v118 = vmin.f32 %v116, 448.0
      %v119 = vmin.f32 %v117, 448.0
      %v122 = vshra.s32 %v118, 20
      %v123 = vshra.s32 %v119, 20
      %v124 = vand.u32 %v122, 1
      %v125 = vand.u32 %v123, 1
      %v126 = vadd.s32 %v118, %v124
      %v127 = vadd.s32 %v119, %v125
      %v128 = vadd.s32 %v126, 524287
      %v129 = vadd.s32 %v127, 524287
      %v130 = vand.u32 %v128, 4293918720
      %v131 = vand.u32 %v129, 4293918720
      %v134 = vpack.c.bf16 %v131, %v130
      %135 = vst [vmem:[#allocation2] sm:$0xff] %v134
      %v136 = vmul.f32 %v108, 0.002232143
      %v137 = vmul.f32 %v109, 0.002232143
      %vm138 = vcmask 7168
      %139 = vst.msk [vmem:[#allocation3] sm:$0xff] %vm138, %v136
      %140 = vst.msk [vmem:[#allocation3 + $0x8] sm:$0xff] %vm138, %v137
    $region17: #{fp8_semi_sparse_activation_linear.1} parent=1 // pred_fallthru
      _
    // Predicated region
    $region18: #{fp8_semi_sparse_activation_linear.1} parent=1 // pred_check
      %p141 = pneg %p17
    $region19: #{fp8_semi_sparse_activation_linear.1} parent=1 // pred_check_branch
      %143 = sbr.rel (%p141) target = $region21
    $region20: #{fp8_semi_sparse_activation_linear.1} parent=1 // pred_region
      %144 = vst [vmem:[#allocation4] sm:$0xff] 0.0
      %145 = vst [vmem:[#allocation4 + $0x8] sm:$0xff] 0.0
    $region21: #{fp8_semi_sparse_activation_linear.1} parent=1 // pred_fallthru
      _
    %v146 = vld [vmem:[#allocation2] sm:$0xff]
    %v147 = vld [vmem:[%s1] sm:$0xff]
    %v148 = vld [vmem:[%s1 + $0x8] sm:$0xff]
    %v149 = vld [vmem:[%s1 + $0x10] sm:$0xff]
    %v150 = vld [vmem:[%s1 + $0x18] sm:$0xff]
    %v151 = vunpack.c.l.f8e4m3fn %v147
    %v152 = vunpack.c.h.f8e4m3fn %v147
    %v153 = vunpack.c.l.f8e4m3fn %v148
    %v154 = vunpack.c.h.f8e4m3fn %v148
    %v155 = vunpack.c.l.f8e4m3fn %v149
    %v156 = vunpack.c.h.f8e4m3fn %v149
    %v157 = vunpack.c.l.f8e4m3fn %v150
    %v158 = vunpack.c.h.f8e4m3fn %v150
    %v159 = vld [vmem:[#allocation4] sm:$0xff]
    %v160 = vld [vmem:[#allocation4 + $0x8] sm:$0xff]
    %161 = vmatprep.subr.bf16.mxu0 0
    %162 = vmatpush1.bf16.msra.mxu0 %v151
    %163 = vmatprep.subr.bf16.mxu0 0
    %164 = vmatpush1.bf16.msra.mxu0 %v152
    %165 = vmatprep.subr.bf16.mxu0 0
    %166 = vmatpush1.bf16.msra.mxu0 %v153
    %167 = vmatprep.subr.bf16.mxu0 0
    %168 = vmatpush1.bf16.msra.mxu0 %v154
    %169 = vmatprep.subr.bf16.mxu0 0
    %170 = vmatpush1.bf16.msra.mxu0 %v155
    %171 = vmatprep.subr.bf16.mxu0 0
    %172 = vmatpush1.bf16.msra.mxu0 %v156
    %173 = vmatprep.subr.bf16.mxu0 0
    %174 = vmatpush1.bf16.msra.mxu0 %v157
    %175 = vmatprep.subr.bf16.mxu0 0
    %176 = vmatpush1.bf16.msra.mxu0 %v158
    %177 = vmatprep.subr.bf16.mxu0 0
    %178 = vmatpush1.bf16.msra.mxu0 0
    %179 = vmatprep.subr.bf16.mxu0 0
    %180 = vmatpush1.bf16.msra.mxu0 0
    %181 = vmatprep.subr.bf16.mxu0 0
    %182 = vmatpush1.bf16.msra.mxu0 0
    %183 = vmatprep.subr.bf16.mxu0 0
    %184 = vmatpush1.bf16.msra.mxu0 0
    %185 = vmatprep.subr.bf16.mxu0 0
    %186 = vmatpush1.bf16.msra.mxu0 0
    %187 = vmatprep.subr.bf16.mxu0 0
    %188 = vmatpush1.bf16.msra.mxu0 0
    %189 = vmatprep.subr.bf16.mxu0 0
    %190 = vmatpush1.bf16.msra.mxu0 0
    %191 = vmatprep.subr.bf16.mxu0 0
    %192 = vmatpush1.bf16.msra.mxu0 0
    %193 = vmatprep.mubr.bf16.mxu0 0
    %194 = vmatmul.mubr.bf16.gmra.mrb[0].mxu0 %v146
    %v195 = vpop.f32.mrb[0].mxu0
    %v196 = vadd.f32 0.0, %v195
    %v197 = vpop.f32.mrb[0].mxu0
    %v198 = vpop.f32.mrb[0].mxu0
    %v199 = vadd.f32 0.0, %v198
    %v200 = vpop.f32.mrb[0].mxu0
    %201 = vdwg.mxu0
    %v202 = vadd.f32 %v159, %v196
    %v203 = vadd.f32 %v160, %v199
    %204 = vst [vmem:[#allocation4] sm:$0xff] %v202
    %205 = vst [vmem:[#allocation4 + $0x8] sm:$0xff] %v203
    // Predicated region
    $region22: #{fp8_semi_sparse_activation_linear.1} parent=1 // pred_check
      %p206 = pneg %p17
    $region23: #{fp8_semi_sparse_activation_linear.1} parent=1 // pred_check_branch
      %208 = sbr.rel (%p206) target = $region25
    $region24: #{fp8_semi_sparse_activation_linear.1} parent=1 // pred_region
      %v209 = vld [vmem:[#allocation4] sm:$0xff]
      %v210 = vld [vmem:[#allocation4 + $0x8] sm:$0xff]
      %v211 = vld [vmem:[#allocation3] sm:$0xff]
      %v212 = vld [vmem:[#allocation3 + $0x8] sm:$0xff]
      %214 = vset.pattern.permute.xlu0 0
      %215 = vperm.xlu0 %214, %v211
      %v216 = vpop.permute.xlu0 %215
      %219 = vset.pattern.permute.xlu0 0
      %220 = vperm.xlu0 %219, %v212
      %v221 = vpop.permute.xlu0 %220
      %v223 = vmul.f32 %v209, %v216
      %v224 = vmul.f32 %v210, %v221
      %v225 = vld [vmem:[%s2] sm:$0x1]
      %v227 = vlaneseq
      %v228 = vshrl.u32 %v227, 7
      %v229 = vsub.s32 0, %v228
      %v230 = vrot.slane %v225, %v229
      %v232 = vmul.f32 %v223, %v230
      %v233 = vmul.f32 %v224, %v230
      %v234 = vpack.c.bf16 %v233, %v232
      %v236 = vunpack.c.l.b16 %v234
      %v237 = vunpack.c.h.b16 %v234
      %v238 = vpack.c.b16 %v236, %v236
      %v239 = vpack.c.b16 %v237, %v237
      %242 = vst [vmem:[#allocation5] sm:$0xf] %v238
      %243 = vst [vmem:[#allocation5 + $0x4] sm:$0xf] %v239
    $region25: #{fp8_semi_sparse_activation_linear.1} parent=1 // pred_fallthru
      _
    // Predicated region
    $region26: #{fp8_semi_sparse_activation_linear.1} parent=1 // pred_check
      _
    $region27: #{fp8_semi_sparse_activation_linear.1} parent=1 // pred_check_branch
      %245 = sbr.rel (0) target = $region29
    $region28: #{fp8_semi_sparse_activation_linear.1} parent=1 // pred_region
      %s247 = ssub.s32 128, 128
      %248 = vsyncadd [#allocation6], %s247
      %s249 = sshll.u32 [#allocation5], 4
      %s250 = int_to_ptr.vmem [resolvable:$true] %s249
      %255 = dma.vmem_to_hbm [thread:$0]  %s250, 128, %s3, [#allocation6], 64, 64, 4
    $region29: #{fp8_semi_sparse_activation_linear.1} parent=1 // pred_fallthru
      _
    // Predicated region
    $region30: #{fp8_semi_sparse_activation_linear.1} parent=1 // pred_check
      _
    $region31: #{fp8_semi_sparse_activation_linear.1} parent=1 // pred_check_branch
      %257 = sbr.rel (0) target = $region33
    $region32: #{fp8_semi_sparse_activation_linear.1} parent=1 // pred_region
      %258 = dma.done [#allocation6], 128
    $region33: #{fp8_semi_sparse_activation_linear.1} parent=1 // pred_fallthru
      _
    %259 = vsyncpa [#allocation6], 1

// kernel: fp8_semi_sparse_activation_linear.1
$region0: #{fp8_semi_sparse_activation_linear.1}
  #allocation0 [shape = 'u32[]', space=smem, size = 0x4, offset = 0x4, fixed_abs, tag = 'smem constant byte address 0x4 - core index']
  #allocation1 [shape = 'u32[144,128]{1,0:T(1,128)}', space=vmem, size = 0x12000, scoped, tag = 'internal scratch']
  #allocation2 [shape = 'bf16[1,16,128]{2,1,0:T(16,128)(2,1)}', space=vmem, size = 0x1000, scoped, tag = 'scratch operand']
  #allocation3 [shape = 'f32[16,1]{1,0:T(8,128)}', space=vmem, size = 0x2000, scoped, tag = 'scratch operand']
  #allocation4 [shape = 'f32[16,128]{1,0:T(8,128)}', space=vmem, size = 0x2000, scoped, tag = 'scratch operand']
  %s0 = inlined_call_operand.vmem [shape: bf16[16,128], index: 0, kind: input, shape index: {}]
  %s1 = inlined_call_operand.hbm [shape: bf16[128,128], index: 1, kind: input, shape index: {}]
  %s2 = inlined_call_operand.vmem [shape: f32[1,128], index: 2, kind: input, shape index: {}]
  %s3 = inlined_call_operand.hbm [shape: bf16[16,128], index: 3, kind: output, shape index: {}]
  %s4 = sld [smem:[#allocation0]]
  $region38: #{fp8_semi_sparse_activation_linear.1} parent=0
    _
  %s6 = ssub.s32 1, %s4
  %s7 = scalar_select 0, %s6, %s4
  $region1: #{fp8_semi_sparse_activation_linear.1} parent=0
    #allocation5 [shape = 'u8[32768]{0}', space=vmem, size = 0x8000, scoped, tag = 'input window, operand 1, single buffered']
    #allocation6 [shape = 's32[1]{0}', space=sflag, size = 0x4, scoped, tag = 'scoped memory for fp8_semi_sparse_activation_linear.1']
    #allocation7 [shape = 's32[1]{0}', space=sflag, size = 0x4, scoped, tag = 'scoped memory for fp8_semi_sparse_activation_linear.1']
    #allocation8 [shape = 'u8[4096]{0}', space=vmem, size = 0x1000, scoped, tag = 'output window, operand 0, single buffered']
    %8 = vsyncpa [#allocation6], 0
    %9 = vsyncpa [#allocation7], 0
    // Predicated region
    $region2: #{fp8_semi_sparse_activation_linear.1} parent=1 // pred_check
      _
    $region3: #{fp8_semi_sparse_activation_linear.1} parent=1 // pred_check_branch
      %11 = sbr.rel (0) target = $region5
    $region4: #{fp8_semi_sparse_activation_linear.1} parent=1 // pred_region
      _
    $region5: #{fp8_semi_sparse_activation_linear.1} parent=1 // pred_fallthru
      _
    // Predicated region
    $region6: #{fp8_semi_sparse_activation_linear.1} parent=1 // pred_check
      _
    $region7: #{fp8_semi_sparse_activation_linear.1} parent=1 // pred_check_branch
      %13 = sbr.rel (0) target = $region9
    $region8: #{fp8_semi_sparse_activation_linear.1} parent=1 // pred_region
      %s15 = ssub.s32 1024, 1024
      %16 = vsyncadd [#allocation6], %s15
      %s17 = sshll.u32 [#allocation5], 4
      %s18 = int_to_ptr.vmem [resolvable:$true] %s17
      %23 = dma.hbm_to_vmem [thread:$0]  %s1, 1024, %s18, [#allocation6], 64, 64, 4
    $region9: #{fp8_semi_sparse_activation_linear.1} parent=1 // pred_fallthru
      _
    // Predicated region
    $region10: #{fp8_semi_sparse_activation_linear.1} parent=1 // pred_check
      _
    $region11: #{fp8_semi_sparse_activation_linear.1} parent=1 // pred_check_branch
      %25 = sbr.rel (0) target = $region13
    $region12: #{fp8_semi_sparse_activation_linear.1} parent=1 // pred_region
      _
    $region13: #{fp8_semi_sparse_activation_linear.1} parent=1 // pred_fallthru
      _
    // Predicated region
    $region14: #{fp8_semi_sparse_activation_linear.1} parent=1 // pred_check
      _
    $region15: #{fp8_semi_sparse_activation_linear.1} parent=1 // pred_check_branch
      %27 = sbr.rel (0) target = $region17
    $region16: #{fp8_semi_sparse_activation_linear.1} parent=1 // pred_region
      %28 = dma.done [#allocation6], 1024
    $region17: #{fp8_semi_sparse_activation_linear.1} parent=1 // pred_fallthru
      _
    %p30 = scmp.eq.s32.totalorder 0, 0
    %p31 = scmp.eq.s32.totalorder 0, 0
    %p32 = pnand %p30, %p31
    %p33 = pneg %p32
    // Predicated region
    $region18: #{fp8_semi_sparse_activation_linear.1} parent=1 // pred_check
      _
    $region19: #{fp8_semi_sparse_activation_linear.1} parent=1 // pred_check_branch
      %35 = sbr.rel (%p32) target = $region21
    $region20: #{fp8_semi_sparse_activation_linear.1} parent=1 // pred_region
      %v36 = vld [vmem:[%s0] sm:$0xf]
      %v37 = vld [vmem:[%s0 + $0x4] sm:$0xf]
      %v38 = vunpack.c.l.bf16 %v36
      %v39 = vunpack.c.l.bf16 %v37
      %v40 = vmax.f32 %v38, 0.0
      %v41 = vmax.f32 %v39, 0.0
      %v42 = vmul.f32 %v40, %v40
      %v43 = vmul.f32 %v41, %v41
      %v44 = vlaneseq
      %v45 = vand.u32 %v44, 127
      %v46 = vand.u32 %v45, 3
      %47 = vrot.lane.b32.xlu0 %v42, 127
      %v48 = vpop.permute.xlu0 %47
      %49 = vrot.lane.b32.xlu0 %v43, 127
      %v50 = vpop.permute.xlu0 %49
      %51 = vrot.lane.b32.xlu0 %v42, 3
      %v52 = vpop.permute.xlu0 %51
      %53 = vrot.lane.b32.xlu0 %v43, 3
      %v54 = vpop.permute.xlu0 %53
      %vm55 = vcmp.ge.s32.totalorder %v46, 3
      %v56 = vsel %vm55, %v52, %v48
      %v57 = vsel %vm55, %v54, %v50
      %vm58 = vcmp.gt.f32.partialorder %v56, %v42
      %vm59 = vcmp.gt.f32.partialorder %v57, %v43
      %vm60 = vcmp.eq.f32.partialorder %v56, %v42
      %vm61 = vcmp.eq.f32.partialorder %v57, %v43
      %vm62 = vmand %vm60, %vm55
      %vm63 = vmand %vm61, %vm55
      %vm64 = vmor %vm58, %vm62
      %vm65 = vmor %vm59, %vm63
      %v66 = vsel %vm64, 1, 0
      %v67 = vsel %vm65, 1, 0
      %68 = vrot.lane.b32.xlu0 %v42, 126
      %v69 = vpop.permute.xlu0 %68
      %70 = vrot.lane.b32.xlu0 %v43, 126
      %v71 = vpop.permute.xlu0 %70
      %72 = vrot.lane.b32.xlu0 %v42, 2
      %v73 = vpop.permute.xlu0 %72
      %74 = vrot.lane.b32.xlu0 %v43, 2
      %v75 = vpop.permute.xlu0 %74
      %vm76 = vcmp.ge.s32.totalorder %v46, 2
      %v77 = vsel %vm76, %v73, %v69
      %v78 = vsel %vm76, %v75, %v71
      %vm79 = vcmp.gt.f32.partialorder %v77, %v42
      %vm80 = vcmp.gt.f32.partialorder %v78, %v43
      %vm81 = vcmp.eq.f32.partialorder %v77, %v42
      %vm82 = vcmp.eq.f32.partialorder %v78, %v43
      %vm83 = vmand %vm81, %vm76
      %vm84 = vmand %vm82, %vm76
      %vm85 = vmor %vm79, %vm83
      %vm86 = vmor %vm80, %vm84
      %v87 = vsel %vm85, 1, 0
      %v88 = vsel %vm86, 1, 0
      %v89 = vadd.s32 %v66, %v87
      %v90 = vadd.s32 %v67, %v88
      %91 = vrot.lane.b32.xlu0 %v42, 125
      %v92 = vpop.permute.xlu0 %91
      %93 = vrot.lane.b32.xlu0 %v43, 125
      %v94 = vpop.permute.xlu0 %93
      %95 = vrot.lane.b32.xlu0 %v42, 1
      %v96 = vpop.permute.xlu0 %95
      %97 = vrot.lane.b32.xlu0 %v43, 1
      %v98 = vpop.permute.xlu0 %97
      %vm99 = vcmp.ge.s32.totalorder %v46, 1
      %v100 = vsel %vm99, %v96, %v92
      %v101 = vsel %vm99, %v98, %v94
      %vm102 = vcmp.gt.f32.partialorder %v100, %v42
      %vm103 = vcmp.gt.f32.partialorder %v101, %v43
      %vm104 = vcmp.eq.f32.partialorder %v100, %v42
      %vm105 = vcmp.eq.f32.partialorder %v101, %v43
      %vm106 = vmand %vm104, %vm99
      %vm107 = vmand %vm105, %vm99
      %vm108 = vmor %vm102, %vm106
      %vm109 = vmor %vm103, %vm107
      %v110 = vsel %vm108, 1, 0
      %v111 = vsel %vm109, 1, 0
      %v112 = vadd.s32 %v89, %v110
      %v113 = vadd.s32 %v90, %v111
      %vm114 = vcmp.lt.s32.totalorder %v112, 2
      %vm115 = vcmp.lt.s32.totalorder %v113, 2
      %v116 = vsel %vm114, %v42, 0.0
      %v117 = vsel %vm115, %v43, 0.0
      %118 = vmax.xlane.f32.xlu0 %v116
      %v119 = vpop.xlane.xlu0 %118
      %120 = vmax.xlane.f32.xlu0 %v117
      %v121 = vpop.xlane.xlu0 %120
      %v122 = vmax.f32 %v119, 1e-12
      %v123 = vmax.f32 %v121, 1e-12
      %v124 = vrcp.pop %v122
      %v125 = vmul.f32 448.0, %v124
      %v126 = vrcp.pop %v123
      %v127 = vmul.f32 448.0, %v126
      %v128 = vmul.f32 %v116, %v125
      %v129 = vmul.f32 %v117, %v127
      %v130 = vmax.f32 %v128, 0.0
      %v131 = vmax.f32 %v129, 0.0
      %v132 = vmin.f32 %v130, 448.0
      %v133 = vmin.f32 %v131, 448.0
      %v136 = vshra.s32 %v132, 20
      %v137 = vshra.s32 %v133, 20
      %v138 = vand.u32 %v136, 1
      %v139 = vand.u32 %v137, 1
      %v140 = vadd.s32 %v132, %v138
      %v141 = vadd.s32 %v133, %v139
      %v142 = vadd.s32 %v140, 524287
      %v143 = vadd.s32 %v141, 524287
      %v144 = vand.u32 %v142, 4293918720
      %v145 = vand.u32 %v143, 4293918720
      %v148 = vpack.c.bf16 %v145, %v144
      %149 = vst [vmem:[#allocation2] sm:$0xff] %v148
      %v150 = vmul.f32 %v122, 0.002232143
      %v151 = vmul.f32 %v123, 0.002232143
      %vm152 = vcmask 7168
      %153 = vst.msk [vmem:[#allocation3] sm:$0xff] %vm152, %v150
      %154 = vst.msk [vmem:[#allocation3 + $0x8] sm:$0xff] %vm152, %v151
    $region21: #{fp8_semi_sparse_activation_linear.1} parent=1 // pred_fallthru
      _
    // Predicated region
    $region22: #{fp8_semi_sparse_activation_linear.1} parent=1 // pred_check
      %p155 = pneg %p31
    $region23: #{fp8_semi_sparse_activation_linear.1} parent=1 // pred_check_branch
      %157 = sbr.rel (%p155) target = $region25
    $region24: #{fp8_semi_sparse_activation_linear.1} parent=1 // pred_region
      %158 = vst [vmem:[#allocation4] sm:$0xff] 0.0
      %159 = vst [vmem:[#allocation4 + $0x8] sm:$0xff] 0.0
    $region25: #{fp8_semi_sparse_activation_linear.1} parent=1 // pred_fallthru
      _
    %v160 = vld [vmem:[#allocation2] sm:$0xff]
    %v161 = vld [vmem:[#allocation5] sm:$0xf]
    %v162 = vld [vmem:[#allocation5 + $0x4] sm:$0xf]
    %v163 = vld [vmem:[#allocation5 + $0x8] sm:$0xf]
    %v164 = vld [vmem:[#allocation5 + $0xc] sm:$0xf]
    %v165 = vld [vmem:[#allocation5 + $0x10] sm:$0xf]
    %v166 = vld [vmem:[#allocation5 + $0x14] sm:$0xf]
    %v167 = vld [vmem:[#allocation5 + $0x18] sm:$0xf]
    %v168 = vld [vmem:[#allocation5 + $0x1c] sm:$0xf]
    %v169 = vld [vmem:[#allocation5 + $0x20] sm:$0xf]
    %v170 = vld [vmem:[#allocation5 + $0x24] sm:$0xf]
    %v171 = vld [vmem:[#allocation5 + $0x28] sm:$0xf]
    %v172 = vld [vmem:[#allocation5 + $0x2c] sm:$0xf]
    %v173 = vld [vmem:[#allocation5 + $0x30] sm:$0xf]
    %v174 = vld [vmem:[#allocation5 + $0x34] sm:$0xf]
    %v175 = vld [vmem:[#allocation5 + $0x38] sm:$0xf]
    %v176 = vld [vmem:[#allocation5 + $0x3c] sm:$0xf]
    %v177 = vld [vmem:[#allocation4] sm:$0xff]
    %v178 = vld [vmem:[#allocation4 + $0x8] sm:$0xff]
    %v195 = vunpack.c.l.b16 %v161
    %v196 = vunpack.c.l.b16 %v162
    %v197 = vunpack.c.l.b16 %v163
    %v198 = vunpack.c.l.b16 %v164
    %v199 = vunpack.c.l.b16 %v165
    %v200 = vunpack.c.l.b16 %v166
    %v201 = vunpack.c.l.b16 %v167
    %v202 = vunpack.c.l.b16 %v168
    %v203 = vunpack.c.l.b16 %v169
    %v204 = vunpack.c.l.b16 %v170
    %v205 = vunpack.c.l.b16 %v171
    %v206 = vunpack.c.l.b16 %v172
    %v207 = vunpack.c.l.b16 %v173
    %v208 = vunpack.c.l.b16 %v174
    %v209 = vunpack.c.l.b16 %v175
    %v210 = vunpack.c.l.b16 %v176
    %v211 = vpack.c.b16 %v196, %v195
    %v212 = vpack.c.b16 %v198, %v197
    %v213 = vpack.c.b16 %v200, %v199
    %v214 = vpack.c.b16 %v202, %v201
    %v215 = vpack.c.b16 %v204, %v203
    %v216 = vpack.c.b16 %v206, %v205
    %v217 = vpack.c.b16 %v208, %v207
    %v218 = vpack.c.b16 %v210, %v209
    %227 = vmatprep.subr.bf16.mxu0 0
    %228 = vmatpush1.bf16.msra.mxu0 %v211
    %229 = vmatprep.subr.bf16.mxu0 0
    %230 = vmatpush1.bf16.msra.mxu0 %v212
    %231 = vmatprep.subr.bf16.mxu0 0
    %232 = vmatpush1.bf16.msra.mxu0 %v213
    %233 = vmatprep.subr.bf16.mxu0 0
    %234 = vmatpush1.bf16.msra.mxu0 %v214
    %235 = vmatprep.subr.bf16.mxu0 0
    %236 = vmatpush1.bf16.msra.mxu0 %v215
    %237 = vmatprep.subr.bf16.mxu0 0
    %238 = vmatpush1.bf16.msra.mxu0 %v216
    %239 = vmatprep.subr.bf16.mxu0 0
    %240 = vmatpush1.bf16.msra.mxu0 %v217
    %241 = vmatprep.subr.bf16.mxu0 0
    %242 = vmatpush1.bf16.msra.mxu0 %v218
    %243 = vmatprep.subr.bf16.mxu0 0
    %244 = vmatpush1.bf16.msra.mxu0 0
    %245 = vmatprep.subr.bf16.mxu0 0
    %246 = vmatpush1.bf16.msra.mxu0 0
    %247 = vmatprep.subr.bf16.mxu0 0
    %248 = vmatpush1.bf16.msra.mxu0 0
    %249 = vmatprep.subr.bf16.mxu0 0
    %250 = vmatpush1.bf16.msra.mxu0 0
    %251 = vmatprep.subr.bf16.mxu0 0
    %252 = vmatpush1.bf16.msra.mxu0 0
    %253 = vmatprep.subr.bf16.mxu0 0
    %254 = vmatpush1.bf16.msra.mxu0 0
    %255 = vmatprep.subr.bf16.mxu0 0
    %256 = vmatpush1.bf16.msra.mxu0 0
    %257 = vmatprep.subr.bf16.mxu0 0
    %258 = vmatpush1.bf16.msra.mxu0 0
    %259 = vmatprep.mubr.bf16.mxu0 0
    %260 = vmatmul.mubr.bf16.gmra.mrb[0].mxu0 %v160
    %v261 = vpop.f32.mrb[0].mxu0
    %v262 = vadd.f32 0.0, %v261
    %v263 = vpop.f32.mrb[0].mxu0
    %v264 = vpop.f32.mrb[0].mxu0
    %v265 = vadd.f32 0.0, %v264
    %v266 = vpop.f32.mrb[0].mxu0
    %267 = vdwg.mxu0
    %v268 = vadd.f32 %v177, %v262
    %v269 = vadd.f32 %v178, %v265
    %270 = vst [vmem:[#allocation4] sm:$0xff] %v268
    %271 = vst [vmem:[#allocation4 + $0x8] sm:$0xff] %v269
    // Predicated region
    $region26: #{fp8_semi_sparse_activation_linear.1} parent=1 // pred_check
      %p272 = pneg %p31
    $region27: #{fp8_semi_sparse_activation_linear.1} parent=1 // pred_check_branch
      %274 = sbr.rel (%p272) target = $region29
    $region28: #{fp8_semi_sparse_activation_linear.1} parent=1 // pred_region
      %v275 = vld [vmem:[#allocation4] sm:$0xff]
      %v276 = vld [vmem:[#allocation4 + $0x8] sm:$0xff]
      %v277 = vld [vmem:[#allocation3] sm:$0xff]
      %v278 = vld [vmem:[#allocation3 + $0x8] sm:$0xff]
      %280 = vset.pattern.permute.xlu0 0
      %281 = vperm.xlu0 %280, %v277
      %v282 = vpop.permute.xlu0 %281
      %285 = vset.pattern.permute.xlu0 0
      %286 = vperm.xlu0 %285, %v278
      %v287 = vpop.permute.xlu0 %286
      %v289 = vmul.f32 %v275, %v282
      %v290 = vmul.f32 %v276, %v287
      %v291 = vld [vmem:[%s2] sm:$0x1]
      %v293 = vlaneseq
      %v294 = vshrl.u32 %v293, 7
      %v295 = vsub.s32 0, %v294
      %v296 = vrot.slane %v291, %v295
      %v298 = vmul.f32 %v289, %v296
      %v299 = vmul.f32 %v290, %v296
      %v300 = vpack.c.bf16 %v299, %v298
      %v302 = vunpack.c.l.b16 %v300
      %v303 = vunpack.c.h.b16 %v300
      %v304 = vpack.c.b16 %v302, %v302
      %v305 = vpack.c.b16 %v303, %v303
      %308 = vst [vmem:[#allocation8] sm:$0xf] %v304
      %309 = vst [vmem:[#allocation8 + $0x4] sm:$0xf] %v305
    $region29: #{fp8_semi_sparse_activation_linear.1} parent=1 // pred_fallthru
      _
    // Predicated region
    $region30: #{fp8_semi_sparse_activation_linear.1} parent=1 // pred_check
      _
    $region31: #{fp8_semi_sparse_activation_linear.1} parent=1 // pred_check_branch
      %311 = sbr.rel (0) target = $region33
    $region32: #{fp8_semi_sparse_activation_linear.1} parent=1 // pred_region
      %s313 = ssub.s32 128, 128
      %314 = vsyncadd [#allocation7], %s313
      %s315 = sshll.u32 [#allocation8], 4
      %s316 = int_to_ptr.vmem [resolvable:$true] %s315
      %321 = dma.vmem_to_hbm [thread:$0]  %s316, 128, %s3, [#allocation7], 64, 64, 4
    $region33: #{fp8_semi_sparse_activation_linear.1} parent=1 // pred_fallthru
      _
    // Predicated region
    $region34: #{fp8_semi_sparse_activation_linear.1} parent=1 // pred_check
      _
    $region35: #{fp8_semi_sparse_activation_linear.1} parent=1 // pred_check_branch
      %323 = sbr.rel (0) target = $region37
    $region36: #{fp8_semi_sparse_activation_linear.1} parent=1 // pred_region
      %324 = dma.done [#allocation7], 128
    $region37: #{fp8_semi_sparse_activation_linear.1} parent=1 // pred_fallthru
      _
    %325 = vsyncpa [#allocation6], 1
    %326 = vsyncpa [#allocation7], 1

</llo_original>
